<compile_context>
chip_gen: v6e
topology: v6e:2x2x1
jax: 0.10.0
libtpu: 0.0.40
codegen_flags: <defaults>
</compile_context>

<pallas_src>
import functools

import jax
import jax.numpy as jnp
from jax.experimental import pallas as pl
from jax.experimental.pallas import tpu as pltpu

NEG_SLOPE = 0.01       # F.leaky_relu default negative_slope
LANE = 128             # TPU lane width
SUBLANE = 8            # TPU sublane count (f32)


def _leaky_relu(v, slope=NEG_SLOPE):
    return jnp.where(v > 0, v, slope * v)


def _round_up(x, m):
    return ((x + m - 1) // m) * m


def mlp_kernel(x_ref,
               w1_ref, b1_ref, w2_ref, b2_ref, w3_ref, b3_ref,
               w4_ref, b4_ref, w5_ref, b5_ref, w6_ref, b6_ref,
               out_ref):
    """Fused forward pass for one (TB, Din_pad) batch tile.

    Weights (bf16) stay resident in VMEM for all grid steps.  Activations are
    cast to bf16 right before each jnp.dot; accumulation / bias / leaky_relu
    run in f32.  Padded lanes are exactly zero (zero weight rows/cols, zero
    bias, leaky_relu(0) == 0) so no garbage leaks between layers.
    """
    def layer(h, w_ref, b_ref, act):
        y = jnp.dot(h.astype(jnp.bfloat16), w_ref[...],
                    preferred_element_type=jnp.float32) + b_ref[...]
        return _leaky_relu(y) if act else y

    h = x_ref[...]                        # (TB, Din_pad) bf16
    h = layer(h, w1_ref, b1_ref, True)    # L1 -> leaky_relu
    h = layer(h, w2_ref, b2_ref, True)    # L2 -> leaky_relu -> dropout_1 (identity, eval)
    h = layer(h, w3_ref, b3_ref, True)    # L3 -> leaky_relu
    h = layer(h, w4_ref, b4_ref, True)    # L4 -> leaky_relu -> dropout_2 (identity, eval)
    h = layer(h, w5_ref, b5_ref, True)    # L5 -> leaky_relu
    out_ref[...] = layer(h, w6_ref, b6_ref, False)   # L6 (no activation)


def layer_dims(input_dim, output_dim):
    return [input_dim,
            input_dim * 2, input_dim * 4, input_dim * 8,
            input_dim * 4, input_dim * 2, output_dim]


def init_params(key, input_dim, output_dim):
    """nn.Linear-style init; weight stored as (in, out) = PyTorch W.T, bias (out,)."""
    dims = layer_dims(input_dim, output_dim)
    params = []
    for i in range(6):
        fan_in, fan_out = dims[i], dims[i + 1]
        key, wk, bk = jax.random.split(key, 3)
        bound = 1.0 / (fan_in ** 0.5)
        w = jax.random.uniform(wk, (fan_in, fan_out), jnp.float32, -bound, bound)
        b = jax.random.uniform(bk, (fan_out,), jnp.float32, -bound, bound)
        params.append((w, b))
    return params


def pad_and_cast_params(params):
    """Zero-pad every feature dim to a multiple of 128 lanes.

    Weights -> bf16 (MXU operands), biases -> f32 (VPU add).  Padded rows/cols
    are zero so padded lanes stay exactly zero through all layers.
    """
    padded = []
    for w, b in params:
        fi, fo = w.shape
        fi_p, fo_p = _round_up(fi, LANE), _round_up(fo, LANE)
        w_p = jnp.zeros((fi_p, fo_p), jnp.bfloat16).at[:fi, :fo].set(
            w.astype(jnp.bfloat16))
        b_p = jnp.zeros((1, fo_p), jnp.float32).at[0, :fo].set(b)
        padded.append((w_p, b_p))
    return padded


@functools.partial(jax.jit, static_argnames=("out_dim", "block_b"))
def neural_network_forward(x, padded_params, out_dim, block_b=512):
    B, Din = x.shape
    Din_pad = padded_params[0][0].shape[0]
    Dout_pad = padded_params[-1][0].shape[1]

    # Batch tile: multiple of 8 sublanes, capped at block_b rows.
    TB = min(block_b, _round_up(B, SUBLANE))
    B_pad = _round_up(B, TB)

    # Store the padded input as bf16: halves streaming-x HBM traffic; identical
    # numerics to the in-kernel f32->bf16 cast before the first matmul.
    x_pad = jnp.zeros((B_pad, Din_pad), jnp.bfloat16).at[:B, :Din].set(
        x.astype(jnp.bfloat16))

    flat_args = [x_pad]
    for w, b in padded_params:
        flat_args.extend([w, b])

    # x / out are batch-tiled; weights & biases use a constant index_map so
    # they are DMA'd once and stay resident in VMEM for the whole grid.
    in_specs = [pl.BlockSpec((TB, Din_pad), lambda i: (i, 0))]
    for w, b in padded_params:
        in_specs.append(pl.BlockSpec(w.shape, lambda i: (0, 0)))
        in_specs.append(pl.BlockSpec(b.shape, lambda i: (0, 0)))

    out_pad = pl.pallas_call(
        mlp_kernel,
        out_shape=jax.ShapeDtypeStruct((B_pad, Dout_pad), jnp.float32),
        grid_spec=pltpu.PrefetchScalarGridSpec(
            num_scalar_prefetch=0,
            grid=(B_pad // TB,),
            in_specs=in_specs,
            out_specs=pl.BlockSpec((TB, Dout_pad), lambda i: (i, 0)),
        ),
        compiler_params=pltpu.CompilerParams(
            dimension_semantics=("parallel",),      # megacore sharding on v7x
            vmem_limit_bytes=32 * 1024 * 1024),
    )(*flat_args)

    return out_pad[:B, :out_dim]


def reference_forward(x, padded_params, out_dim):
    """Pure-JAX reference with identical numerics (bf16 operands, f32 accum)."""
    B, Din = x.shape
    Din_pad = padded_params[0][0].shape[0]
    h = jnp.zeros((B, Din_pad), jnp.float32).at[:, :Din].set(x)
    acts = [True, True, True, True, True, False]
    for (w, b), act in zip(padded_params, acts):
        h = jnp.dot(h.astype(jnp.bfloat16), w,
                    preferred_element_type=jnp.float32) + b
        if act:
            h = _leaky_relu(h)
    return h[:, :out_dim]


if __name__ == "__main__":
    key = jax.random.PRNGKey(0)
    key, xkey, pkey = jax.random.split(key, 3)

    batch = 8
    input_dim = 16
    output_dim = 8

    x = jax.random.normal(xkey, (batch, input_dim), dtype=jnp.float32)
    params = init_params(pkey, input_dim, output_dim)
    padded_params = pad_and_cast_params(params)

    out = neural_network_forward(x, padded_params, output_dim)
    out = jax.block_until_ready(out)

    ref = reference_forward(x, padded_params, output_dim)
    assert out.shape == (batch, output_dim), out.shape
    assert jnp.allclose(out, ref, atol=1e-4, rtol=1e-4), "mismatch vs reference"

    print("KERNEL_OK")
</pallas_src>

<mosaic_0001>
module attributes {stable_mosaic.version = 11 : i64} {
  func.func @mlp_kernel(%arg0: i32, %arg1: memref<8x128xbf16, #tpu.memory_space<vmem>>, %arg2: memref<128x128xbf16, #tpu.memory_space<vmem>>, %arg3: memref<1x128xf32, #tpu.memory_space<vmem>>, %arg4: memref<128x128xbf16, #tpu.memory_space<vmem>>, %arg5: memref<1x128xf32, #tpu.memory_space<vmem>>, %arg6: memref<128x128xbf16, #tpu.memory_space<vmem>>, %arg7: memref<1x128xf32, #tpu.memory_space<vmem>>, %arg8: memref<128x128xbf16, #tpu.memory_space<vmem>>, %arg9: memref<1x128xf32, #tpu.memory_space<vmem>>, %arg10: memref<128x128xbf16, #tpu.memory_space<vmem>>, %arg11: memref<1x128xf32, #tpu.memory_space<vmem>>, %arg12: memref<128x128xbf16, #tpu.memory_space<vmem>>, %arg13: memref<1x128xf32, #tpu.memory_space<vmem>>, %arg14: memref<8x128xf32, #tpu.memory_space<vmem>>) attributes {dimension_semantics = [#tpu.dimension_semantics<parallel>], iteration_bounds = array<i64: 1>, scalar_prefetch = 0 : i64, scratch_operands = 0 : i64, tpu.core_type = #tpu.core_type<tc>, window_params = [{transform_indices = @transform_0, window_bounds = array<i64: 8, 128>}, {pipeline_mode = #tpu.pipeline_mode<synchronous>, transform_indices = @transform_1, window_bounds = array<i64: 128, 128>}, {pipeline_mode = #tpu.pipeline_mode<synchronous>, transform_indices = @transform_2, window_bounds = array<i64: 1, 128>}, {pipeline_mode = #tpu.pipeline_mode<synchronous>, transform_indices = @transform_3, window_bounds = array<i64: 128, 128>}, {pipeline_mode = #tpu.pipeline_mode<synchronous>, transform_indices = @transform_4, window_bounds = array<i64: 1, 128>}, {pipeline_mode = #tpu.pipeline_mode<synchronous>, transform_indices = @transform_5, window_bounds = array<i64: 128, 128>}, {pipeline_mode = #tpu.pipeline_mode<synchronous>, transform_indices = @transform_6, window_bounds = array<i64: 1, 128>}, {pipeline_mode = #tpu.pipeline_mode<synchronous>, transform_indices = @transform_7, window_bounds = array<i64: 128, 128>}, {pipeline_mode = #tpu.pipeline_mode<synchronous>, transform_indices = @transform_8, window_bounds = array<i64: 1, 128>}, {pipeline_mode = #tpu.pipeline_mode<synchronous>, transform_indices = @transform_9, window_bounds = array<i64: 128, 128>}, {pipeline_mode = #tpu.pipeline_mode<synchronous>, transform_indices = @transform_10, window_bounds = array<i64: 1, 128>}, {pipeline_mode = #tpu.pipeline_mode<synchronous>, transform_indices = @transform_11, window_bounds = array<i64: 128, 128>}, {pipeline_mode = #tpu.pipeline_mode<synchronous>, transform_indices = @transform_12, window_bounds = array<i64: 1, 128>}, {transform_indices = @transform_13, window_bounds = array<i64: 8, 128>}]} {
    %c0 = arith.constant 0 : index
    %c0_0 = arith.constant 0 : index
    %0 = vector.load %arg1[%c0, %c0_0] : memref<8x128xbf16, #tpu.memory_space<vmem>>, vector<8x128xbf16>
    %c0_1 = arith.constant 0 : index
    %c0_2 = arith.constant 0 : index
    %1 = vector.load %arg2[%c0_1, %c0_2] : memref<128x128xbf16, #tpu.memory_space<vmem>>, vector<128x128xbf16>
    %cst = arith.constant dense<0.000000e+00> : vector<8x128xf32>
    %2 = tpu.matmul %0, %1, %cst {dimension_numbers = #tpu.dot_dimension_numbers<[1], [0], [0], [1], [0, 0, 1, 1], [], []>} : vector<8x128xbf16>, vector<128x128xbf16>, vector<8x128xf32> -> vector<8x128xf32>
    %c0_3 = arith.constant 0 : index
    %c0_4 = arith.constant 0 : index
    %3 = vector.load %arg3[%c0_3, %c0_4] : memref<1x128xf32, #tpu.memory_space<vmem>>, vector<1x128xf32>
    %4 = vector.broadcast %3 : vector<1x128xf32> to vector<8x128xf32>
    %5 = arith.addf %2, %4 : vector<8x128xf32>
    %cst_5 = arith.constant 0.000000e+00 : f32
    %6 = vector.broadcast %cst_5 : f32 to vector<8x128xf32>
    %7 = arith.cmpf ogt, %5, %6 : vector<8x128xf32>
    %cst_6 = arith.constant 0.00999999977 : f32
    %8 = vector.broadcast %cst_6 : f32 to vector<8x128xf32>
    %9 = arith.mulf %8, %5 : vector<8x128xf32>
    %10 = arith.select %7, %5, %9 : vector<8x128xi1>, vector<8x128xf32>
    %11 = arith.truncf %10 : vector<8x128xf32> to vector<8x128xbf16>
    %c0_7 = arith.constant 0 : index
    %c0_8 = arith.constant 0 : index
    %12 = vector.load %arg4[%c0_7, %c0_8] : memref<128x128xbf16, #tpu.memory_space<vmem>>, vector<128x128xbf16>
    %cst_9 = arith.constant dense<0.000000e+00> : vector<8x128xf32>
    %13 = tpu.matmul %11, %12, %cst_9 {dimension_numbers = #tpu.dot_dimension_numbers<[1], [0], [0], [1], [0, 0, 1, 1], [], []>} : vector<8x128xbf16>, vector<128x128xbf16>, vector<8x128xf32> -> vector<8x128xf32>
    %c0_10 = arith.constant 0 : index
    %c0_11 = arith.constant 0 : index
    %14 = vector.load %arg5[%c0_10, %c0_11] : memref<1x128xf32, #tpu.memory_space<vmem>>, vector<1x128xf32>
    %15 = vector.broadcast %14 : vector<1x128xf32> to vector<8x128xf32>
    %16 = arith.addf %13, %15 : vector<8x128xf32>
    %cst_12 = arith.constant 0.000000e+00 : f32
    %17 = vector.broadcast %cst_12 : f32 to vector<8x128xf32>
    %18 = arith.cmpf ogt, %16, %17 : vector<8x128xf32>
    %cst_13 = arith.constant 0.00999999977 : f32
    %19 = vector.broadcast %cst_13 : f32 to vector<8x128xf32>
    %20 = arith.mulf %19, %16 : vector<8x128xf32>
    %21 = arith.select %18, %16, %20 : vector<8x128xi1>, vector<8x128xf32>
    %22 = arith.truncf %21 : vector<8x128xf32> to vector<8x128xbf16>
    %c0_14 = arith.constant 0 : index
    %c0_15 = arith.constant 0 : index
    %23 = vector.load %arg6[%c0_14, %c0_15] : memref<128x128xbf16, #tpu.memory_space<vmem>>, vector<128x128xbf16>
    %cst_16 = arith.constant dense<0.000000e+00> : vector<8x128xf32>
    %24 = tpu.matmul %22, %23, %cst_16 {dimension_numbers = #tpu.dot_dimension_numbers<[1], [0], [0], [1], [0, 0, 1, 1], [], []>} : vector<8x128xbf16>, vector<128x128xbf16>, vector<8x128xf32> -> vector<8x128xf32>
    %c0_17 = arith.constant 0 : index
    %c0_18 = arith.constant 0 : index
    %25 = vector.load %arg7[%c0_17, %c0_18] : memref<1x128xf32, #tpu.memory_space<vmem>>, vector<1x128xf32>
    %26 = vector.broadcast %25 : vector<1x128xf32> to vector<8x128xf32>
    %27 = arith.addf %24, %26 : vector<8x128xf32>
    %cst_19 = arith.constant 0.000000e+00 : f32
    %28 = vector.broadcast %cst_19 : f32 to vector<8x128xf32>
    %29 = arith.cmpf ogt, %27, %28 : vector<8x128xf32>
    %cst_20 = arith.constant 0.00999999977 : f32
    %30 = vector.broadcast %cst_20 : f32 to vector<8x128xf32>
    %31 = arith.mulf %30, %27 : vector<8x128xf32>
    %32 = arith.select %29, %27, %31 : vector<8x128xi1>, vector<8x128xf32>
    %33 = arith.truncf %32 : vector<8x128xf32> to vector<8x128xbf16>
    %c0_21 = arith.constant 0 : index
    %c0_22 = arith.constant 0 : index
    %34 = vector.load %arg8[%c0_21, %c0_22] : memref<128x128xbf16, #tpu.memory_space<vmem>>, vector<128x128xbf16>
    %cst_23 = arith.constant dense<0.000000e+00> : vector<8x128xf32>
    %35 = tpu.matmul %33, %34, %cst_23 {dimension_numbers = #tpu.dot_dimension_numbers<[1], [0], [0], [1], [0, 0, 1, 1], [], []>} : vector<8x128xbf16>, vector<128x128xbf16>, vector<8x128xf32> -> vector<8x128xf32>
    %c0_24 = arith.constant 0 : index
    %c0_25 = arith.constant 0 : index
    %36 = vector.load %arg9[%c0_24, %c0_25] : memref<1x128xf32, #tpu.memory_space<vmem>>, vector<1x128xf32>
    %37 = vector.broadcast %36 : vector<1x128xf32> to vector<8x128xf32>
    %38 = arith.addf %35, %37 : vector<8x128xf32>
    %cst_26 = arith.constant 0.000000e+00 : f32
    %39 = vector.broadcast %cst_26 : f32 to vector<8x128xf32>
    %40 = arith.cmpf ogt, %38, %39 : vector<8x128xf32>
    %cst_27 = arith.constant 0.00999999977 : f32
    %41 = vector.broadcast %cst_27 : f32 to vector<8x128xf32>
    %42 = arith.mulf %41, %38 : vector<8x128xf32>
    %43 = arith.select %40, %38, %42 : vector<8x128xi1>, vector<8x128xf32>
    %44 = arith.truncf %43 : vector<8x128xf32> to vector<8x128xbf16>
    %c0_28 = arith.constant 0 : index
    %c0_29 = arith.constant 0 : index
    %45 = vector.load %arg10[%c0_28, %c0_29] : memref<128x128xbf16, #tpu.memory_space<vmem>>, vector<128x128xbf16>
    %cst_30 = arith.constant dense<0.000000e+00> : vector<8x128xf32>
    %46 = tpu.matmul %44, %45, %cst_30 {dimension_numbers = #tpu.dot_dimension_numbers<[1], [0], [0], [1], [0, 0, 1, 1], [], []>} : vector<8x128xbf16>, vector<128x128xbf16>, vector<8x128xf32> -> vector<8x128xf32>
    %c0_31 = arith.constant 0 : index
    %c0_32 = arith.constant 0 : index
    %47 = vector.load %arg11[%c0_31, %c0_32] : memref<1x128xf32, #tpu.memory_space<vmem>>, vector<1x128xf32>
    %48 = vector.broadcast %47 : vector<1x128xf32> to vector<8x128xf32>
    %49 = arith.addf %46, %48 : vector<8x128xf32>
    %cst_33 = arith.constant 0.000000e+00 : f32
    %50 = vector.broadcast %cst_33 : f32 to vector<8x128xf32>
    %51 = arith.cmpf ogt, %49, %50 : vector<8x128xf32>
    %cst_34 = arith.constant 0.00999999977 : f32
    %52 = vector.broadcast %cst_34 : f32 to vector<8x128xf32>
    %53 = arith.mulf %52, %49 : vector<8x128xf32>
    %54 = arith.select %51, %49, %53 : vector<8x128xi1>, vector<8x128xf32>
    %55 = arith.truncf %54 : vector<8x128xf32> to vector<8x128xbf16>
    %c0_35 = arith.constant 0 : index
    %c0_36 = arith.constant 0 : index
    %56 = vector.load %arg12[%c0_35, %c0_36] : memref<128x128xbf16, #tpu.memory_space<vmem>>, vector<128x128xbf16>
    %cst_37 = arith.constant dense<0.000000e+00> : vector<8x128xf32>
    %57 = tpu.matmul %55, %56, %cst_37 {dimension_numbers = #tpu.dot_dimension_numbers<[1], [0], [0], [1], [0, 0, 1, 1], [], []>} : vector<8x128xbf16>, vector<128x128xbf16>, vector<8x128xf32> -> vector<8x128xf32>
    %c0_38 = arith.constant 0 : index
    %c0_39 = arith.constant 0 : index
    %58 = vector.load %arg13[%c0_38, %c0_39] : memref<1x128xf32, #tpu.memory_space<vmem>>, vector<1x128xf32>
    %59 = vector.broadcast %58 : vector<1x128xf32> to vector<8x128xf32>
    %60 = arith.addf %57, %59 : vector<8x128xf32>
    %c0_40 = arith.constant 0 : index
    %c0_41 = arith.constant 0 : index
    %61 = vector.load %arg14[%c0_40, %c0_41] : memref<8x128xf32, #tpu.memory_space<vmem>>, vector<8x128xf32>
    tpu.vector_store %arg14[%c0_40, %c0_41], %60 {strides = array<i32>} : memref<8x128xf32, #tpu.memory_space<vmem>>, vector<8x128xf32>,
    return
  }
  func.func @transform_0(%arg0: i32) -> (i32, i32) {
    %c0_i32 = arith.constant 0 : i32
    %c0_i32_0 = arith.constant 0 : i32
    return %arg0, %c0_i32 : i32, i32
  }
  func.func @transform_1(%arg0: i32) -> (i32, i32) {
    %c0_i32 = arith.constant 0 : i32
    %c0_i32_0 = arith.constant 0 : i32
    %c0_i32_1 = arith.constant 0 : i32
    return %c0_i32, %c0_i32_0 : i32, i32
  }
  func.func @transform_2(%arg0: i32) -> (i32, i32) {
    %c0_i32 = arith.constant 0 : i32
    %c0_i32_0 = arith.constant 0 : i32
    %c0_i32_1 = arith.constant 0 : i32
    return %c0_i32, %c0_i32_0 : i32, i32
  }
  func.func @transform_3(%arg0: i32) -> (i32, i32) {
    %c0_i32 = arith.constant 0 : i32
    %c0_i32_0 = arith.constant 0 : i32
    %c0_i32_1 = arith.constant 0 : i32
    return %c0_i32, %c0_i32_0 : i32, i32
  }
  func.func @transform_4(%arg0: i32) -> (i32, i32) {
    %c0_i32 = arith.constant 0 : i32
    %c0_i32_0 = arith.constant 0 : i32
    %c0_i32_1 = arith.constant 0 : i32
    return %c0_i32, %c0_i32_0 : i32, i32
  }
  func.func @transform_5(%arg0: i32) -> (i32, i32) {
    %c0_i32 = arith.constant 0 : i32
    %c0_i32_0 = arith.constant 0 : i32
    %c0_i32_1 = arith.constant 0 : i32
    return %c0_i32, %c0_i32_0 : i32, i32
  }
  func.func @transform_6(%arg0: i32) -> (i32, i32) {
    %c0_i32 = arith.constant 0 : i32
    %c0_i32_0 = arith.constant 0 : i32
    %c0_i32_1 = arith.constant 0 : i32
    return %c0_i32, %c0_i32_0 : i32, i32
  }
  func.func @transform_7(%arg0: i32) -> (i32, i32) {
    %c0_i32 = arith.constant 0 : i32
    %c0_i32_0 = arith.constant 0 : i32
    %c0_i32_1 = arith.constant 0 : i32
    return %c0_i32, %c0_i32_0 : i32, i32
  }
  func.func @transform_8(%arg0: i32) -> (i32, i32) {
    %c0_i32 = arith.constant 0 : i32
    %c0_i32_0 = arith.constant 0 : i32
    %c0_i32_1 = arith.constant 0 : i32
    return %c0_i32, %c0_i32_0 : i32, i32
  }
  func.func @transform_9(%arg0: i32) -> (i32, i32) {
    %c0_i32 = arith.constant 0 : i32
    %c0_i32_0 = arith.constant 0 : i32
    %c0_i32_1 = arith.constant 0 : i32
    return %c0_i32, %c0_i32_0 : i32, i32
  }
  func.func @transform_10(%arg0: i32) -> (i32, i32) {
    %c0_i32 = arith.constant 0 : i32
    %c0_i32_0 = arith.constant 0 : i32
    %c0_i32_1 = arith.constant 0 : i32
    return %c0_i32, %c0_i32_0 : i32, i32
  }
  func.func @transform_11(%arg0: i32) -> (i32, i32) {
    %c0_i32 = arith.constant 0 : i32
    %c0_i32_0 = arith.constant 0 : i32
    %c0_i32_1 = arith.constant 0 : i32
    return %c0_i32, %c0_i32_0 : i32, i32
  }
  func.func @transform_12(%arg0: i32) -> (i32, i32) {
    %c0_i32 = arith.constant 0 : i32
    %c0_i32_0 = arith.constant 0 : i32
    %c0_i32_1 = arith.constant 0 : i32
    return %c0_i32, %c0_i32_0 : i32, i32
  }
  func.func @transform_13(%arg0: i32) -> (i32, i32) {
    %c0_i32 = arith.constant 0 : i32
    %c0_i32_0 = arith.constant 0 : i32
    return %arg0, %c0_i32 : i32, i32
  }
}

</mosaic_0001>

<llo_original>
// kernel: neural_network_forward.1
$region0: #{neural_network_forward.1}
  #allocation0 [shape = 'u32[]', space=smem, size = 0x4, offset = 0x4, fixed_abs, tag = 'smem constant byte address 0x4 - core index']
  #allocation1 [shape = 'u32[144,128]{1,0:T(1,128)}', space=vmem, size = 0x12000, scoped, tag = 'internal scratch']
  %s0 = inlined_call_operand.vmem [shape: bf16[8,128], index: 0, kind: input, shape index: {}]
  %s1 = inlined_call_operand.hbm [shape: bf16[128,128], index: 1, kind: input, shape index: {}]
  %s2 = inlined_call_operand.vmem [shape: f32[1,128], index: 2, kind: input, shape index: {}]
  %s3 = inlined_call_operand.hbm [shape: bf16[128,128], index: 3, kind: input, shape index: {}]
  %s4 = inlined_call_operand.vmem [shape: f32[1,128], index: 4, kind: input, shape index: {}]
  %s5 = inlined_call_operand.hbm [shape: bf16[128,128], index: 5, kind: input, shape index: {}]
  %s6 = inlined_call_operand.vmem [shape: f32[1,128], index: 6, kind: input, shape index: {}]
  %s7 = inlined_call_operand.hbm [shape: bf16[128,128], index: 7, kind: input, shape index: {}]
  %s8 = inlined_call_operand.vmem [shape: f32[1,128], index: 8, kind: input, shape index: {}]
  %s9 = inlined_call_operand.hbm [shape: bf16[128,128], index: 9, kind: input, shape index: {}]
  %s10 = inlined_call_operand.vmem [shape: f32[1,128], index: 10, kind: input, shape index: {}]
  %s11 = inlined_call_operand.hbm [shape: bf16[128,128], index: 11, kind: input, shape index: {}]
  %s12 = inlined_call_operand.vmem [shape: f32[1,128], index: 12, kind: input, shape index: {}]
  %s13 = inlined_call_operand.hbm [shape: f32[8,128], index: 13, kind: output, shape index: {}]
  %s14 = sld [smem:[#allocation0]]
  $region86: #{neural_network_forward.1} parent=0
    _
  %s16 = ssub.s32 1, %s14
  %s17 = scalar_select 0, %s16, %s14
  $region1: #{neural_network_forward.1} parent=0
    #allocation2 [shape = 'u8[32768]{0}', space=vmem, size = 0x8000, scoped, tag = 'input window, operand 1, single buffered']
    #allocation3 [shape = 's32[1]{0}', space=sflag, size = 0x4, scoped, tag = 'scoped memory for neural_network_forward.1']
    #allocation4 [shape = 's32[1]{0}', space=sflag, size = 0x4, scoped, tag = 'scoped memory for neural_network_forward.1']
    #allocation5 [shape = 'u8[32768]{0}', space=vmem, size = 0x8000, scoped, tag = 'input window, operand 3, single buffered']
    #allocation6 [shape = 's32[1]{0}', space=sflag, size = 0x4, scoped, tag = 'scoped memory for neural_network_forward.1']
    #allocation7 [shape = 'u8[32768]{0}', space=vmem, size = 0x8000, scoped, tag = 'input window, operand 5, single buffered']
    #allocation8 [shape = 'u8[32768]{0}', space=vmem, size = 0x8000, scoped, tag = 'input window, operand 7, single buffered']
    #allocation9 [shape = 's32[1]{0}', space=sflag, size = 0x4, scoped, tag = 'scoped memory for neural_network_forward.1']
    #allocation10 [shape = 'u8[32768]{0}', space=vmem, size = 0x8000, scoped, tag = 'input window, operand 9, single buffered']
    #allocation11 [shape = 'u8[32768]{0}', space=vmem, size = 0x8000, scoped, tag = 'input window, operand 11, single buffered']
    #allocation12 [shape = 's32[1]{0}', space=sflag, size = 0x4, scoped, tag = 'scoped memory for neural_network_forward.1']
    #allocation13 [shape = 'u8[4096]{0}', space=vmem, size = 0x1000, scoped, tag = 'output window, operand 0, single buffered']
    %18 = vsyncpa [#allocation3], 0
    %19 = vsyncpa [#allocation6], 0
    %20 = vsyncpa [#allocation9], 0
    %21 = vsyncpa [#allocation12], 0
    %22 = vsyncpa [#allocation4], 0
    // Predicated region
    $region2: #{neural_network_forward.1} parent=1 // pred_check
      _
    $region3: #{neural_network_forward.1} parent=1 // pred_check_branch
      %24 = sbr.rel (0) target = $region5
    $region4: #{neural_network_forward.1} parent=1 // pred_region
      _
    $region5: #{neural_network_forward.1} parent=1 // pred_fallthru
      _
    // Predicated region
    $region6: #{neural_network_forward.1} parent=1 // pred_check
      _
    $region7: #{neural_network_forward.1} parent=1 // pred_check_branch
      %26 = sbr.rel (0) target = $region9
    $region8: #{neural_network_forward.1} parent=1 // pred_region
      %s28 = ssub.s32 1024, 1024
      %29 = vsyncadd [#allocation3], %s28
      %s30 = sshll.u32 [#allocation2], 4
      %s31 = int_to_ptr.vmem [resolvable:$true] %s30
      %36 = dma.hbm_to_vmem [thread:$0]  %s1, 1024, %s31, [#allocation3], 64, 64, 4
    $region9: #{neural_network_forward.1} parent=1 // pred_fallthru
      _
    // Predicated region
    $region10: #{neural_network_forward.1} parent=1 // pred_check
      _
    $region11: #{neural_network_forward.1} parent=1 // pred_check_branch
      %38 = sbr.rel (0) target = $region13
    $region12: #{neural_network_forward.1} parent=1 // pred_region
      _
    $region13: #{neural_network_forward.1} parent=1 // pred_fallthru
      _
    // Predicated region
    $region14: #{neural_network_forward.1} parent=1 // pred_check
      _
    $region15: #{neural_network_forward.1} parent=1 // pred_check_branch
      %40 = sbr.rel (0) target = $region17
    $region16: #{neural_network_forward.1} parent=1 // pred_region
      %s42 = ssub.s32 1024, 1024
      %43 = vsyncadd [#allocation6], %s42
      %s44 = sshll.u32 [#allocation5], 4
      %s45 = int_to_ptr.vmem [resolvable:$true] %s44
      %50 = dma.hbm_to_vmem [thread:$0]  %s3, 1024, %s45, [#allocation6], 64, 64, 4
    $region17: #{neural_network_forward.1} parent=1 // pred_fallthru
      _
    // Predicated region
    $region18: #{neural_network_forward.1} parent=1 // pred_check
      _
    $region19: #{neural_network_forward.1} parent=1 // pred_check_branch
      %52 = sbr.rel (0) target = $region21
    $region20: #{neural_network_forward.1} parent=1 // pred_region
      _
    $region21: #{neural_network_forward.1} parent=1 // pred_fallthru
      _
    // Predicated region
    $region22: #{neural_network_forward.1} parent=1 // pred_check
      _
    $region23: #{neural_network_forward.1} parent=1 // pred_check_branch
      %54 = sbr.rel (0) target = $region25
    $region24: #{neural_network_forward.1} parent=1 // pred_region
      %s56 = ssub.s32 1024, 1024
      %57 = vsyncadd [#allocation6], %s56
      %s58 = sshll.u32 [#allocation7], 4
      %s59 = int_to_ptr.vmem [resolvable:$true] %s58
      %64 = dma.hbm_to_vmem [thread:$0]  %s5, 1024, %s59, [#allocation6], 64, 64, 4
    $region25: #{neural_network_forward.1} parent=1 // pred_fallthru
      _
    // Predicated region
    $region26: #{neural_network_forward.1} parent=1 // pred_check
      _
    $region27: #{neural_network_forward.1} parent=1 // pred_check_branch
      %66 = sbr.rel (0) target = $region29
    $region28: #{neural_network_forward.1} parent=1 // pred_region
      _
    $region29: #{neural_network_forward.1} parent=1 // pred_fallthru
      _
    // Predicated region
    $region30: #{neural_network_forward.1} parent=1 // pred_check
      _
    $region31: #{neural_network_forward.1} parent=1 // pred_check_branch
      %68 = sbr.rel (0) target = $region33
    $region32: #{neural_network_forward.1} parent=1 // pred_region
      %s70 = ssub.s32 1024, 1024
      %71 = vsyncadd [#allocation9], %s70
      %s72 = sshll.u32 [#allocation8], 4
      %s73 = int_to_ptr.vmem [resolvable:$true] %s72
      %78 = dma.hbm_to_vmem [thread:$0]  %s7, 1024, %s73, [#allocation9], 64, 64, 4
    $region33: #{neural_network_forward.1} parent=1 // pred_fallthru
      _
    // Predicated region
    $region34: #{neural_network_forward.1} parent=1 // pred_check
      _
    $region35: #{neural_network_forward.1} parent=1 // pred_check_branch
      %80 = sbr.rel (0) target = $region37
    $region36: #{neural_network_forward.1} parent=1 // pred_region
      _
    $region37: #{neural_network_forward.1} parent=1 // pred_fallthru
      _
    // Predicated region
    $region38: #{neural_network_forward.1} parent=1 // pred_check
      _
    $region39: #{neural_network_forward.1} parent=1 // pred_check_branch
      %82 = sbr.rel (0) target = $region41
    $region40: #{neural_network_forward.1} parent=1 // pred_region
      %s84 = ssub.s32 1024, 1024
      %85 = vsyncadd [#allocation9], %s84
      %s86 = sshll.u32 [#allocation10], 4
      %s87 = int_to_ptr.vmem [resolvable:$true] %s86
      %92 = dma.hbm_to_vmem [thread:$0]  %s9, 1024, %s87, [#allocation9], 64, 64, 4
    $region41: #{neural_network_forward.1} parent=1 // pred_fallthru
      _
    // Predicated region
    $region42: #{neural_network_forward.1} parent=1 // pred_check
      _
    $region43: #{neural_network_forward.1} parent=1 // pred_check_branch
      %94 = sbr.rel (0) target = $region45
    $region44: #{neural_network_forward.1} parent=1 // pred_region
      _
    $region45: #{neural_network_forward.1} parent=1 // pred_fallthru
      _
    // Predicated region
    $region46: #{neural_network_forward.1} parent=1 // pred_check
      _
    $region47: #{neural_network_forward.1} parent=1 // pred_check_branch
      %96 = sbr.rel (0) target = $region49
    $region48: #{neural_network_forward.1} parent=1 // pred_region
      %s98 = ssub.s32 1024, 1024
      %99 = vsyncadd [#allocation12], %s98
      %s100 = sshll.u32 [#allocation11], 4
      %s101 = int_to_ptr.vmem [resolvable:$true] %s100
      %106 = dma.hbm_to_vmem [thread:$0]  %s11, 1024, %s101, [#allocation12], 64, 64, 4
    $region49: #{neural_network_forward.1} parent=1 // pred_fallthru
      _
    // Predicated region
    $region50: #{neural_network_forward.1} parent=1 // pred_check
      _
    $region51: #{neural_network_forward.1} parent=1 // pred_check_branch
      %108 = sbr.rel (0) target = $region53
    $region52: #{neural_network_forward.1} parent=1 // pred_region
      _
    $region53: #{neural_network_forward.1} parent=1 // pred_fallthru
      _
    // Predicated region
    $region54: #{neural_network_forward.1} parent=1 // pred_check
      _
    $region55: #{neural_network_forward.1} parent=1 // pred_check_branch
      %110 = sbr.rel (0) target = $region57
    $region56: #{neural_network_forward.1} parent=1 // pred_region
      %111 = dma.done [#allocation3], 1024
    $region57: #{neural_network_forward.1} parent=1 // pred_fallthru
      _
    // Predicated region
    $region58: #{neural_network_forward.1} parent=1 // pred_check
      _
    $region59: #{neural_network_forward.1} parent=1 // pred_check_branch
      %113 = sbr.rel (0) target = $region61
    $region60: #{neural_network_forward.1} parent=1 // pred_region
      %114 = dma.done [#allocation6], 1024
    $region61: #{neural_network_forward.1} parent=1 // pred_fallthru
      _
    // Predicated region
    $region62: #{neural_network_forward.1} parent=1 // pred_check
      _
    $region63: #{neural_network_forward.1} parent=1 // pred_check_branch
      %116 = sbr.rel (0) target = $region65
    $region64: #{neural_network_forward.1} parent=1 // pred_region
      %117 = dma.done [#allocation6], 1024
    $region65: #{neural_network_forward.1} parent=1 // pred_fallthru
      _
    // Predicated region
    $region66: #{neural_network_forward.1} parent=1 // pred_check
      _
    $region67: #{neural_network_forward.1} parent=1 // pred_check_branch
      %119 = sbr.rel (0) target = $region69
    $region68: #{neural_network_forward.1} parent=1 // pred_region
      %120 = dma.done [#allocation9], 1024
    $region69: #{neural_network_forward.1} parent=1 // pred_fallthru
      _
    // Predicated region
    $region70: #{neural_network_forward.1} parent=1 // pred_check
      _
    $region71: #{neural_network_forward.1} parent=1 // pred_check_branch
      %122 = sbr.rel (0) target = $region73
    $region72: #{neural_network_forward.1} parent=1 // pred_region
      %123 = dma.done [#allocation9], 1024
    $region73: #{neural_network_forward.1} parent=1 // pred_fallthru
      _
    // Predicated region
    $region74: #{neural_network_forward.1} parent=1 // pred_check
      _
    $region75: #{neural_network_forward.1} parent=1 // pred_check_branch
      %125 = sbr.rel (0) target = $region77
    $region76: #{neural_network_forward.1} parent=1 // pred_region
      %126 = dma.done [#allocation12], 1024
    $region77: #{neural_network_forward.1} parent=1 // pred_fallthru
      _
    %v128 = vld [vmem:[%s0] sm:$0xf]
    %v129 = vld [vmem:[#allocation2] sm:$0xf]
    %v130 = vld [vmem:[#allocation2 + $0x4] sm:$0xf]
    %v131 = vld [vmem:[#allocation2 + $0x8] sm:$0xf]
    %v132 = vld [vmem:[#allocation2 + $0xc] sm:$0xf]
    %v133 = vld [vmem:[#allocation2 + $0x10] sm:$0xf]
    %v134 = vld [vmem:[#allocation2 + $0x14] sm:$0xf]
    %v135 = vld [vmem:[#allocation2 + $0x18] sm:$0xf]
    %v136 = vld [vmem:[#allocation2 + $0x1c] sm:$0xf]
    %v137 = vld [vmem:[#allocation2 + $0x20] sm:$0xf]
    %v138 = vld [vmem:[#allocation2 + $0x24] sm:$0xf]
    %v139 = vld [vmem:[#allocation2 + $0x28] sm:$0xf]
    %v140 = vld [vmem:[#allocation2 + $0x2c] sm:$0xf]
    %v141 = vld [vmem:[#allocation2 + $0x30] sm:$0xf]
    %v142 = vld [vmem:[#allocation2 + $0x34] sm:$0xf]
    %v143 = vld [vmem:[#allocation2 + $0x38] sm:$0xf]
    %v144 = vld [vmem:[#allocation2 + $0x3c] sm:$0xf]
    %v145 = vld [vmem:[%s2] sm:$0x1]
    %v147 = vlaneseq
    %v148 = vshrl.u32 %v147, 7
    %v149 = vsub.s32 0, %v148
    %v150 = vrot.slane %v145, %v149
    %v168 = vunpack.c.l.b16 %v129
    %v169 = vunpack.c.l.b16 %v130
    %v170 = vunpack.c.l.b16 %v131
    %v171 = vunpack.c.l.b16 %v132
    %v172 = vunpack.c.l.b16 %v133
    %v173 = vunpack.c.l.b16 %v134
    %v174 = vunpack.c.l.b16 %v135
    %v175 = vunpack.c.l.b16 %v136
    %v176 = vunpack.c.l.b16 %v137
    %v177 = vunpack.c.l.b16 %v138
    %v178 = vunpack.c.l.b16 %v139
    %v179 = vunpack.c.l.b16 %v140
    %v180 = vunpack.c.l.b16 %v141
    %v181 = vunpack.c.l.b16 %v142
    %v182 = vunpack.c.l.b16 %v143
    %v183 = vunpack.c.l.b16 %v144
    %v184 = vpack.c.b16 %v169, %v168
    %v185 = vpack.c.b16 %v171, %v170
    %v186 = vpack.c.b16 %v173, %v172
    %v187 = vpack.c.b16 %v175, %v174
    %v188 = vpack.c.b16 %v177, %v176
    %v189 = vpack.c.b16 %v179, %v178
    %v190 = vpack.c.b16 %v181, %v180
    %v191 = vpack.c.b16 %v183, %v182
    %200 = vmatprep.subr.bf16.mxu0 0
    %201 = vmatpush1.bf16.msra.mxu0 %v191
    %202 = vmatprep.subr.bf16.mxu0 0
    %203 = vmatpush1.bf16.msra.mxu0 %v190
    %204 = vmatprep.subr.bf16.mxu0 0
    %205 = vmatpush1.bf16.msra.mxu0 %v189
    %206 = vmatprep.subr.bf16.mxu0 0
    %207 = vmatpush1.bf16.msra.mxu0 %v188
    %208 = vmatprep.subr.bf16.mxu0 0
    %209 = vmatpush1.bf16.msra.mxu0 %v187
    %210 = vmatprep.subr.bf16.mxu0 0
    %211 = vmatpush1.bf16.msra.mxu0 %v186
    %212 = vmatprep.subr.bf16.mxu0 0
    %213 = vmatpush1.bf16.msra.mxu0 %v185
    %214 = vmatprep.subr.bf16.mxu0 0
    %215 = vmatpush1.bf16.msra.mxu0 %v184
    %216 = vmatprep.subr.bf16.mxu0 0
    %217 = vmatpush2.bf16.msra.mxu0 0
    %218 = vmatprep.subr.bf16.mxu0 0
    %219 = vmatpush2.bf16.msra.mxu0 0
    %220 = vmatprep.subr.bf16.mxu0 0
    %221 = vmatpush2.bf16.msra.mxu0 0
    %222 = vmatprep.subr.bf16.mxu0 0
    %223 = vmatpush2.bf16.msra.mxu0 0
    %224 = vmatprep.subr.bf16.mxu0 0
    %225 = vmatpush2.bf16.msra.mxu0 0
    %226 = vmatprep.subr.bf16.mxu0 0
    %227 = vmatpush2.bf16.msra.mxu0 0
    %228 = vmatprep.subr.bf16.mxu0 0
    %229 = vmatpush2.bf16.msra.mxu0 0
    %230 = vmatprep.subr.bf16.mxu0 0
    %231 = vmatpush2.bf16.msra.mxu0 0
    %232 = vmatprep.mubr.bf16.mxu0 0
    %233 = vmatmul.mubr.bf16.gmra.mxu0 %v128
    %v234 = vpop.f32.mrf.mxu0
    %v235 = vadd.f32 %v150, %v234
    %v236 = vpop.f32.mrf.mxu0
    %v237 = vpop.f32.mrf.mxu0
    %v238 = vpop.f32.mrf.mxu0
    %239 = vdwg.mxu0
    %vm240 = vcmp.gt.f32.partialorder %v235, 0.0
    %v241 = vmul.f32 %v235, 0.01
    %v242 = vsel %vm240, %v235, %v241
    %v243 = vpack.c.bf16 %v242, %v242
    %v244 = vld [vmem:[#allocation5] sm:$0xf]
    %v245 = vld [vmem:[#allocation5 + $0x4] sm:$0xf]
    %v246 = vld [vmem:[#allocation5 + $0x8] sm:$0xf]
    %v247 = vld [vmem:[#allocation5 + $0xc] sm:$0xf]
    %v248 = vld [vmem:[#allocation5 + $0x10] sm:$0xf]
    %v249 = vld [vmem:[#allocation5 + $0x14] sm:$0xf]
    %v250 = vld [vmem:[#allocation5 + $0x18] sm:$0xf]
    %v251 = vld [vmem:[#allocation5 + $0x1c] sm:$0xf]
    %v252 = vld [vmem:[#allocation5 + $0x20] sm:$0xf]
    %v253 = vld [vmem:[#allocation5 + $0x24] sm:$0xf]
    %v254 = vld [vmem:[#allocation5 + $0x28] sm:$0xf]
    %v255 = vld [vmem:[#allocation5 + $0x2c] sm:$0xf]
    %v256 = vld [vmem:[#allocation5 + $0x30] sm:$0xf]
    %v257 = vld [vmem:[#allocation5 + $0x34] sm:$0xf]
    %v258 = vld [vmem:[#allocation5 + $0x38] sm:$0xf]
    %v259 = vld [vmem:[#allocation5 + $0x3c] sm:$0xf]
    %v260 = vld [vmem:[%s4] sm:$0x1]
    %v262 = vlaneseq
    %v263 = vshrl.u32 %v262, 7
    %v264 = vsub.s32 0, %v263
    %v265 = vrot.slane %v260, %v264
    %v283 = vunpack.c.l.b16 %v244
    %v284 = vunpack.c.l.b16 %v245
    %v285 = vunpack.c.l.b16 %v246
    %v286 = vunpack.c.l.b16 %v247
    %v287 = vunpack.c.l.b16 %v248
    %v288 = vunpack.c.l.b16 %v249
    %v289 = vunpack.c.l.b16 %v250
    %v290 = vunpack.c.l.b16 %v251
    %v291 = vunpack.c.l.b16 %v252
    %v292 = vunpack.c.l.b16 %v253
    %v293 = vunpack.c.l.b16 %v254
    %v294 = vunpack.c.l.b16 %v255
    %v295 = vunpack.c.l.b16 %v256
    %v296 = vunpack.c.l.b16 %v257
    %v297 = vunpack.c.l.b16 %v258
    %v298 = vunpack.c.l.b16 %v259
    %v299 = vpack.c.b16 %v284, %v283
    %v300 = vpack.c.b16 %v286, %v285
    %v301 = vpack.c.b16 %v288, %v287
    %v302 = vpack.c.b16 %v290, %v289
    %v303 = vpack.c.b16 %v292, %v291
    %v304 = vpack.c.b16 %v294, %v293
    %v305 = vpack.c.b16 %v296, %v295
    %v306 = vpack.c.b16 %v298, %v297
    %315 = vmatprep.subr.bf16.mxu0 0
    %316 = vmatpush1.bf16.msra.mxu0 %v306
    %317 = vmatprep.subr.bf16.mxu0 0
    %318 = vmatpush1.bf16.msra.mxu0 %v305
    %319 = vmatprep.subr.bf16.mxu0 0
    %320 = vmatpush1.bf16.msra.mxu0 %v304
    %321 = vmatprep.subr.bf16.mxu0 0
    %322 = vmatpush1.bf16.msra.mxu0 %v303
    %323 = vmatprep.subr.bf16.mxu0 0
    %324 = vmatpush1.bf16.msra.mxu0 %v302
    %325 = vmatprep.subr.bf16.mxu0 0
    %326 = vmatpush1.bf16.msra.mxu0 %v301
    %327 = vmatprep.subr.bf16.mxu0 0
    %328 = vmatpush1.bf16.msra.mxu0 %v300
    %329 = vmatprep.subr.bf16.mxu0 0
    %330 = vmatpush1.bf16.msra.mxu0 %v299
    %331 = vmatprep.subr.bf16.mxu0 0
    %332 = vmatpush2.bf16.msra.mxu0 0
    %333 = vmatprep.subr.bf16.mxu0 0
    %334 = vmatpush2.bf16.msra.mxu0 0
    %335 = vmatprep.subr.bf16.mxu0 0
    %336 = vmatpush2.bf16.msra.mxu0 0
    %337 = vmatprep.subr.bf16.mxu0 0
    %338 = vmatpush2.bf16.msra.mxu0 0
    %339 = vmatprep.subr.bf16.mxu0 0
    %340 = vmatpush2.bf16.msra.mxu0 0
    %341 = vmatprep.subr.bf16.mxu0 0
    %342 = vmatpush2.bf16.msra.mxu0 0
    %343 = vmatprep.subr.bf16.mxu0 0
    %344 = vmatpush2.bf16.msra.mxu0 0
    %345 = vmatprep.subr.bf16.mxu0 0
    %346 = vmatpush2.bf16.msra.mxu0 0
    %347 = vmatprep.mubr.bf16.mxu0 0
    %348 = vmatmul.mubr.bf16.gmra.mxu0 %v243
    %v349 = vpop.f32.mrf.mxu0
    %v350 = vadd.f32 %v265, %v349
    %v351 = vpop.f32.mrf.mxu0
    %v352 = vpop.f32.mrf.mxu0
    %v353 = vpop.f32.mrf.mxu0
    %354 = vdwg.mxu0
    %vm355 = vcmp.gt.f32.partialorder %v350, 0.0
    %v356 = vmul.f32 %v350, 0.01
    %v357 = vsel %vm355, %v350, %v356
    %v358 = vpack.c.bf16 %v357, %v357
    %v359 = vld [vmem:[#allocation7] sm:$0xf]
    %v360 = vld [vmem:[#allocation7 + $0x4] sm:$0xf]
    %v361 = vld [vmem:[#allocation7 + $0x8] sm:$0xf]
    %v362 = vld [vmem:[#allocation7 + $0xc] sm:$0xf]
    %v363 = vld [vmem:[#allocation7 + $0x10] sm:$0xf]
    %v364 = vld [vmem:[#allocation7 + $0x14] sm:$0xf]
    %v365 = vld [vmem:[#allocation7 + $0x18] sm:$0xf]
    %v366 = vld [vmem:[#allocation7 + $0x1c] sm:$0xf]
    %v367 = vld [vmem:[#allocation7 + $0x20] sm:$0xf]
    %v368 = vld [vmem:[#allocation7 + $0x24] sm:$0xf]
    %v369 = vld [vmem:[#allocation7 + $0x28] sm:$0xf]
    %v370 = vld [vmem:[#allocation7 + $0x2c] sm:$0xf]
    %v371 = vld [vmem:[#allocation7 + $0x30] sm:$0xf]
    %v372 = vld [vmem:[#allocation7 + $0x34] sm:$0xf]
    %v373 = vld [vmem:[#allocation7 + $0x38] sm:$0xf]
    %v374 = vld [vmem:[#allocation7 + $0x3c] sm:$0xf]
    %v375 = vld [vmem:[%s6] sm:$0x1]
    %v377 = vlaneseq
    %v378 = vshrl.u32 %v377, 7
    %v379 = vsub.s32 0, %v378
    %v380 = vrot.slane %v375, %v379
    %v398 = vunpack.c.l.b16 %v359
    %v399 = vunpack.c.l.b16 %v360
    %v400 = vunpack.c.l.b16 %v361
    %v401 = vunpack.c.l.b16 %v362
    %v402 = vunpack.c.l.b16 %v363
    %v403 = vunpack.c.l.b16 %v364
    %v404 = vunpack.c.l.b16 %v365
    %v405 = vunpack.c.l.b16 %v366
    %v406 = vunpack.c.l.b16 %v367
    %v407 = vunpack.c.l.b16 %v368
    %v408 = vunpack.c.l.b16 %v369
    %v409 = vunpack.c.l.b16 %v370
    %v410 = vunpack.c.l.b16 %v371
    %v411 = vunpack.c.l.b16 %v372
    %v412 = vunpack.c.l.b16 %v373
    %v413 = vunpack.c.l.b16 %v374
    %v414 = vpack.c.b16 %v399, %v398
    %v415 = vpack.c.b16 %v401, %v400
    %v416 = vpack.c.b16 %v403, %v402
    %v417 = vpack.c.b16 %v405, %v404
    %v418 = vpack.c.b16 %v407, %v406
    %v419 = vpack.c.b16 %v409, %v408
    %v420 = vpack.c.b16 %v411, %v410
    %v421 = vpack.c.b16 %v413, %v412
    %430 = vmatprep.subr.bf16.mxu0 0
    %431 = vmatpush1.bf16.msra.mxu0 %v421
    %432 = vmatprep.subr.bf16.mxu0 0
    %433 = vmatpush1.bf16.msra.mxu0 %v420
    %434 = vmatprep.subr.bf16.mxu0 0
    %435 = vmatpush1.bf16.msra.mxu0 %v419
    %436 = vmatprep.subr.bf16.mxu0 0
    %437 = vmatpush1.bf16.msra.mxu0 %v418
    %438 = vmatprep.subr.bf16.mxu0 0
    %439 = vmatpush1.bf16.msra.mxu0 %v417
    %440 = vmatprep.subr.bf16.mxu0 0
    %441 = vmatpush1.bf16.msra.mxu0 %v416
    %442 = vmatprep.subr.bf16.mxu0 0
    %443 = vmatpush1.bf16.msra.mxu0 %v415
    %444 = vmatprep.subr.bf16.mxu0 0
    %445 = vmatpush1.bf16.msra.mxu0 %v414
    %446 = vmatprep.subr.bf16.mxu0 0
    %447 = vmatpush2.bf16.msra.mxu0 0
    %448 = vmatprep.subr.bf16.mxu0 0
    %449 = vmatpush2.bf16.msra.mxu0 0
    %450 = vmatprep.subr.bf16.mxu0 0
    %451 = vmatpush2.bf16.msra.mxu0 0
    %452 = vmatprep.subr.bf16.mxu0 0
    %453 = vmatpush2.bf16.msra.mxu0 0
    %454 = vmatprep.subr.bf16.mxu0 0
    %455 = vmatpush2.bf16.msra.mxu0 0
    %456 = vmatprep.subr.bf16.mxu0 0
    %457 = vmatpush2.bf16.msra.mxu0 0
    %458 = vmatprep.subr.bf16.mxu0 0
    %459 = vmatpush2.bf16.msra.mxu0 0
    %460 = vmatprep.subr.bf16.mxu0 0
    %461 = vmatpush2.bf16.msra.mxu0 0
    %462 = vmatprep.mubr.bf16.mxu0 0
    %463 = vmatmul.mubr.bf16.gmra.mxu0 %v358
    %v464 = vpop.f32.mrf.mxu0
    %v465 = vadd.f32 %v380, %v464
    %v466 = vpop.f32.mrf.mxu0
    %v467 = vpop.f32.mrf.mxu0
    %v468 = vpop.f32.mrf.mxu0
    %469 = vdwg.mxu0
    %vm470 = vcmp.gt.f32.partialorder %v465, 0.0
    %v471 = vmul.f32 %v465, 0.01
    %v472 = vsel %vm470, %v465, %v471
    %v473 = vpack.c.bf16 %v472, %v472
    %v474 = vld [vmem:[#allocation8] sm:$0xf]
    %v475 = vld [vmem:[#allocation8 + $0x4] sm:$0xf]
    %v476 = vld [vmem:[#allocation8 + $0x8] sm:$0xf]
    %v477 = vld [vmem:[#allocation8 + $0xc] sm:$0xf]
    %v478 = vld [vmem:[#allocation8 + $0x10] sm:$0xf]
    %v479 = vld [vmem:[#allocation8 + $0x14] sm:$0xf]
    %v480 = vld [vmem:[#allocation8 + $0x18] sm:$0xf]
    %v481 = vld [vmem:[#allocation8 + $0x1c] sm:$0xf]
    %v482 = vld [vmem:[#allocation8 + $0x20] sm:$0xf]
    %v483 = vld [vmem:[#allocation8 + $0x24] sm:$0xf]
    %v484 = vld [vmem:[#allocation8 + $0x28] sm:$0xf]
    %v485 = vld [vmem:[#allocation8 + $0x2c] sm:$0xf]
    %v486 = vld [vmem:[#allocation8 + $0x30] sm:$0xf]
    %v487 = vld [vmem:[#allocation8 + $0x34] sm:$0xf]
    %v488 = vld [vmem:[#allocation8 + $0x38] sm:$0xf]
    %v489 = vld [vmem:[#allocation8 + $0x3c] sm:$0xf]
    %v490 = vld [vmem:[%s8] sm:$0x1]
    %v492 = vlaneseq
    %v493 = vshrl.u32 %v492, 7
    %v494 = vsub.s32 0, %v493
    %v495 = vrot.slane %v490, %v494
    %v513 = vunpack.c.l.b16 %v474
    %v514 = vunpack.c.l.b16 %v475
    %v515 = vunpack.c.l.b16 %v476
    %v516 = vunpack.c.l.b16 %v477
    %v517 = vunpack.c.l.b16 %v478
    %v518 = vunpack.c.l.b16 %v479
    %v519 = vunpack.c.l.b16 %v480
    %v520 = vunpack.c.l.b16 %v481
    %v521 = vunpack.c.l.b16 %v482
    %v522 = vunpack.c.l.b16 %v483
    %v523 = vunpack.c.l.b16 %v484
    %v524 = vunpack.c.l.b16 %v485
    %v525 = vunpack.c.l.b16 %v486
    %v526 = vunpack.c.l.b16 %v487
    %v527 = vunpack.c.l.b16 %v488
    %v528 = vunpack.c.l.b16 %v489
    %v529 = vpack.c.b16 %v514, %v513
    %v530 = vpack.c.b16 %v516, %v515
    %v531 = vpack.c.b16 %v518, %v517
    %v532 = vpack.c.b16 %v520, %v519
    %v533 = vpack.c.b16 %v522, %v521
    %v534 = vpack.c.b16 %v524, %v523
    %v535 = vpack.c.b16 %v526, %v525
    %v536 = vpack.c.b16 %v528, %v527
    %545 = vmatprep.subr.bf16.mxu0 0
    %546 = vmatpush1.bf16.msra.mxu0 %v536
    %547 = vmatprep.subr.bf16.mxu0 0
    %548 = vmatpush1.bf16.msra.mxu0 %v535
    %549 = vmatprep.subr.bf16.mxu0 0
    %550 = vmatpush1.bf16.msra.mxu0 %v534
    %551 = vmatprep.subr.bf16.mxu0 0
    %552 = vmatpush1.bf16.msra.mxu0 %v533
    %553 = vmatprep.subr.bf16.mxu0 0
    %554 = vmatpush1.bf16.msra.mxu0 %v532
    %555 = vmatprep.subr.bf16.mxu0 0
    %556 = vmatpush1.bf16.msra.mxu0 %v531
    %557 = vmatprep.subr.bf16.mxu0 0
    %558 = vmatpush1.bf16.msra.mxu0 %v530
    %559 = vmatprep.subr.bf16.mxu0 0
    %560 = vmatpush1.bf16.msra.mxu0 %v529
    %561 = vmatprep.subr.bf16.mxu0 0
    %562 = vmatpush2.bf16.msra.mxu0 0
    %563 = vmatprep.subr.bf16.mxu0 0
    %564 = vmatpush2.bf16.msra.mxu0 0
    %565 = vmatprep.subr.bf16.mxu0 0
    %566 = vmatpush2.bf16.msra.mxu0 0
    %567 = vmatprep.subr.bf16.mxu0 0
    %568 = vmatpush2.bf16.msra.mxu0 0
    %569 = vmatprep.subr.bf16.mxu0 0
    %570 = vmatpush2.bf16.msra.mxu0 0
    %571 = vmatprep.subr.bf16.mxu0 0
    %572 = vmatpush2.bf16.msra.mxu0 0
    %573 = vmatprep.subr.bf16.mxu0 0
    %574 = vmatpush2.bf16.msra.mxu0 0
    %575 = vmatprep.subr.bf16.mxu0 0
    %576 = vmatpush2.bf16.msra.mxu0 0
    %577 = vmatprep.mubr.bf16.mxu0 0
    %578 = vmatmul.mubr.bf16.gmra.mxu0 %v473
    %v579 = vpop.f32.mrf.mxu0
    %v580 = vadd.f32 %v495, %v579
    %v581 = vpop.f32.mrf.mxu0
    %v582 = vpop.f32.mrf.mxu0
    %v583 = vpop.f32.mrf.mxu0
    %584 = vdwg.mxu0
    %vm585 = vcmp.gt.f32.partialorder %v580, 0.0
    %v586 = vmul.f32 %v580, 0.01
    %v587 = vsel %vm585, %v580, %v586
    %v588 = vpack.c.bf16 %v587, %v587
    %v589 = vld [vmem:[#allocation10] sm:$0xf]
    %v590 = vld [vmem:[#allocation10 + $0x4] sm:$0xf]
    %v591 = vld [vmem:[#allocation10 + $0x8] sm:$0xf]
    %v592 = vld [vmem:[#allocation10 + $0xc] sm:$0xf]
    %v593 = vld [vmem:[#allocation10 + $0x10] sm:$0xf]
    %v594 = vld [vmem:[#allocation10 + $0x14] sm:$0xf]
    %v595 = vld [vmem:[#allocation10 + $0x18] sm:$0xf]
    %v596 = vld [vmem:[#allocation10 + $0x1c] sm:$0xf]
    %v597 = vld [vmem:[#allocation10 + $0x20] sm:$0xf]
    %v598 = vld [vmem:[#allocation10 + $0x24] sm:$0xf]
    %v599 = vld [vmem:[#allocation10 + $0x28] sm:$0xf]
    %v600 = vld [vmem:[#allocation10 + $0x2c] sm:$0xf]
    %v601 = vld [vmem:[#allocation10 + $0x30] sm:$0xf]
    %v602 = vld [vmem:[#allocation10 + $0x34] sm:$0xf]
    %v603 = vld [vmem:[#allocation10 + $0x38] sm:$0xf]
    %v604 = vld [vmem:[#allocation10 + $0x3c] sm:$0xf]
    %v605 = vld [vmem:[%s10] sm:$0x1]
    %v607 = vlaneseq
    %v608 = vshrl.u32 %v607, 7
    %v609 = vsub.s32 0, %v608
    %v610 = vrot.slane %v605, %v609
    %v628 = vunpack.c.l.b16 %v589
    %v629 = vunpack.c.l.b16 %v590
    %v630 = vunpack.c.l.b16 %v591
    %v631 = vunpack.c.l.b16 %v592
    %v632 = vunpack.c.l.b16 %v593
    %v633 = vunpack.c.l.b16 %v594
    %v634 = vunpack.c.l.b16 %v595
    %v635 = vunpack.c.l.b16 %v596
    %v636 = vunpack.c.l.b16 %v597
    %v637 = vunpack.c.l.b16 %v598
    %v638 = vunpack.c.l.b16 %v599
    %v639 = vunpack.c.l.b16 %v600
    %v640 = vunpack.c.l.b16 %v601
    %v641 = vunpack.c.l.b16 %v602
    %v642 = vunpack.c.l.b16 %v603
    %v643 = vunpack.c.l.b16 %v604
    %v644 = vpack.c.b16 %v629, %v628
    %v645 = vpack.c.b16 %v631, %v630
    %v646 = vpack.c.b16 %v633, %v632
    %v647 = vpack.c.b16 %v635, %v634
    %v648 = vpack.c.b16 %v637, %v636
    %v649 = vpack.c.b16 %v639, %v638
    %v650 = vpack.c.b16 %v641, %v640
    %v651 = vpack.c.b16 %v643, %v642
    %660 = vmatprep.subr.bf16.mxu0 0
    %661 = vmatpush1.bf16.msra.mxu0 %v651
    %662 = vmatprep.subr.bf16.mxu0 0
    %663 = vmatpush1.bf16.msra.mxu0 %v650
    %664 = vmatprep.subr.bf16.mxu0 0
    %665 = vmatpush1.bf16.msra.mxu0 %v649
    %666 = vmatprep.subr.bf16.mxu0 0
    %667 = vmatpush1.bf16.msra.mxu0 %v648
    %668 = vmatprep.subr.bf16.mxu0 0
    %669 = vmatpush1.bf16.msra.mxu0 %v647
    %670 = vmatprep.subr.bf16.mxu0 0
    %671 = vmatpush1.bf16.msra.mxu0 %v646
    %672 = vmatprep.subr.bf16.mxu0 0
    %673 = vmatpush1.bf16.msra.mxu0 %v645
    %674 = vmatprep.subr.bf16.mxu0 0
    %675 = vmatpush1.bf16.msra.mxu0 %v644
    %676 = vmatprep.subr.bf16.mxu0 0
    %677 = vmatpush2.bf16.msra.mxu0 0
    %678 = vmatprep.subr.bf16.mxu0 0
    %679 = vmatpush2.bf16.msra.mxu0 0
    %680 = vmatprep.subr.bf16.mxu0 0
    %681 = vmatpush2.bf16.msra.mxu0 0
    %682 = vmatprep.subr.bf16.mxu0 0
    %683 = vmatpush2.bf16.msra.mxu0 0
    %684 = vmatprep.subr.bf16.mxu0 0
    %685 = vmatpush2.bf16.msra.mxu0 0
    %686 = vmatprep.subr.bf16.mxu0 0
    %687 = vmatpush2.bf16.msra.mxu0 0
    %688 = vmatprep.subr.bf16.mxu0 0
    %689 = vmatpush2.bf16.msra.mxu0 0
    %690 = vmatprep.subr.bf16.mxu0 0
    %691 = vmatpush2.bf16.msra.mxu0 0
    %692 = vmatprep.mubr.bf16.mxu0 0
    %693 = vmatmul.mubr.bf16.gmra.mxu0 %v588
    %v694 = vpop.f32.mrf.mxu0
    %v695 = vadd.f32 %v610, %v694
    %v696 = vpop.f32.mrf.mxu0
    %v697 = vpop.f32.mrf.mxu0
    %v698 = vpop.f32.mrf.mxu0
    %699 = vdwg.mxu0
    %vm700 = vcmp.gt.f32.partialorder %v695, 0.0
    %v701 = vmul.f32 %v695, 0.01
    %v702 = vsel %vm700, %v695, %v701
    %v703 = vpack.c.bf16 %v702, %v702
    %v704 = vld [vmem:[#allocation11] sm:$0xf]
    %v705 = vld [vmem:[#allocation11 + $0x4] sm:$0xf]
    %v706 = vld [vmem:[#allocation11 + $0x8] sm:$0xf]
    %v707 = vld [vmem:[#allocation11 + $0xc] sm:$0xf]
    %v708 = vld [vmem:[#allocation11 + $0x10] sm:$0xf]
    %v709 = vld [vmem:[#allocation11 + $0x14] sm:$0xf]
    %v710 = vld [vmem:[#allocation11 + $0x18] sm:$0xf]
    %v711 = vld [vmem:[#allocation11 + $0x1c] sm:$0xf]
    %v712 = vld [vmem:[#allocation11 + $0x20] sm:$0xf]
    %v713 = vld [vmem:[#allocation11 + $0x24] sm:$0xf]
    %v714 = vld [vmem:[#allocation11 + $0x28] sm:$0xf]
    %v715 = vld [vmem:[#allocation11 + $0x2c] sm:$0xf]
    %v716 = vld [vmem:[#allocation11 + $0x30] sm:$0xf]
    %v717 = vld [vmem:[#allocation11 + $0x34] sm:$0xf]
    %v718 = vld [vmem:[#allocation11 + $0x38] sm:$0xf]
    %v719 = vld [vmem:[#allocation11 + $0x3c] sm:$0xf]
    %v720 = vld [vmem:[%s12] sm:$0x1]
    %v722 = vlaneseq
    %v723 = vshrl.u32 %v722, 7
    %v724 = vsub.s32 0, %v723
    %v725 = vrot.slane %v720, %v724
    %v743 = vunpack.c.l.b16 %v704
    %v744 = vunpack.c.l.b16 %v705
    %v745 = vunpack.c.l.b16 %v706
    %v746 = vunpack.c.l.b16 %v707
    %v747 = vunpack.c.l.b16 %v708
    %v748 = vunpack.c.l.b16 %v709
    %v749 = vunpack.c.l.b16 %v710
    %v750 = vunpack.c.l.b16 %v711
    %v751 = vunpack.c.l.b16 %v712
    %v752 = vunpack.c.l.b16 %v713
    %v753 = vunpack.c.l.b16 %v714
    %v754 = vunpack.c.l.b16 %v715
    %v755 = vunpack.c.l.b16 %v716
    %v756 = vunpack.c.l.b16 %v717
    %v757 = vunpack.c.l.b16 %v718
    %v758 = vunpack.c.l.b16 %v719
    %v759 = vpack.c.b16 %v744, %v743
    %v760 = vpack.c.b16 %v746, %v745
    %v761 = vpack.c.b16 %v748, %v747
    %v762 = vpack.c.b16 %v750, %v749
    %v763 = vpack.c.b16 %v752, %v751
    %v764 = vpack.c.b16 %v754, %v753
    %v765 = vpack.c.b16 %v756, %v755
    %v766 = vpack.c.b16 %v758, %v757
    %775 = vmatprep.subr.bf16.mxu0 0
    %776 = vmatpush1.bf16.msra.mxu0 %v766
    %777 = vmatprep.subr.bf16.mxu0 0
    %778 = vmatpush1.bf16.msra.mxu0 %v765
    %779 = vmatprep.subr.bf16.mxu0 0
    %780 = vmatpush1.bf16.msra.mxu0 %v764
    %781 = vmatprep.subr.bf16.mxu0 0
    %782 = vmatpush1.bf16.msra.mxu0 %v763
    %783 = vmatprep.subr.bf16.mxu0 0
    %784 = vmatpush1.bf16.msra.mxu0 %v762
    %785 = vmatprep.subr.bf16.mxu0 0
    %786 = vmatpush1.bf16.msra.mxu0 %v761
    %787 = vmatprep.subr.bf16.mxu0 0
    %788 = vmatpush1.bf16.msra.mxu0 %v760
    %789 = vmatprep.subr.bf16.mxu0 0
    %790 = vmatpush1.bf16.msra.mxu0 %v759
    %791 = vmatprep.subr.bf16.mxu0 0
    %792 = vmatpush2.bf16.msra.mxu0 0
    %793 = vmatprep.subr.bf16.mxu0 0
    %794 = vmatpush2.bf16.msra.mxu0 0
    %795 = vmatprep.subr.bf16.mxu0 0
    %796 = vmatpush2.bf16.msra.mxu0 0
    %797 = vmatprep.subr.bf16.mxu0 0
    %798 = vmatpush2.bf16.msra.mxu0 0
    %799 = vmatprep.subr.bf16.mxu0 0
    %800 = vmatpush2.bf16.msra.mxu0 0
    %801 = vmatprep.subr.bf16.mxu0 0
    %802 = vmatpush2.bf16.msra.mxu0 0
    %803 = vmatprep.subr.bf16.mxu0 0
    %804 = vmatpush2.bf16.msra.mxu0 0
    %805 = vmatprep.subr.bf16.mxu0 0
    %806 = vmatpush2.bf16.msra.mxu0 0
    %807 = vmatprep.mubr.bf16.mxu0 0
    %808 = vmatmul.mubr.bf16.gmra.mxu0 %v703
    %v809 = vpop.f32.mrf.mxu0
    %v810 = vadd.f32 %v725, %v809
    %v811 = vpop.f32.mrf.mxu0
    %v812 = vpop.f32.mrf.mxu0
    %v813 = vpop.f32.mrf.mxu0
    %814 = vdwg.mxu0
    %815 = vst [vmem:[#allocation13] sm:$0xff] %v810
    // Predicated region
    $region78: #{neural_network_forward.1} parent=1 // pred_check
      _
    $region79: #{neural_network_forward.1} parent=1 // pred_check_branch
      %817 = sbr.rel (0) target = $region81
    $region80: #{neural_network_forward.1} parent=1 // pred_region
      %s819 = ssub.s32 128, 128
      %820 = vsyncadd [#allocation4], %s819
      %s822 = sshll.u32 [#allocation13], 4
      %s823 = int_to_ptr.vmem [resolvable:$true] %s822
      %825 = dma.vmem_to_hbm [thread:$0]  %s823, 128, %s13, [#allocation4]
    $region81: #{neural_network_forward.1} parent=1 // pred_fallthru
      _
    // Predicated region
    $region82: #{neural_network_forward.1} parent=1 // pred_check
      _
    $region83: #{neural_network_forward.1} parent=1 // pred_check_branch
      %827 = sbr.rel (0) target = $region85
    $region84: #{neural_network_forward.1} parent=1 // pred_region
      %828 = dma.done [#allocation4], 128
    $region85: #{neural_network_forward.1} parent=1 // pred_fallthru
      _
    %829 = vsyncpa [#allocation3], 1
    %830 = vsyncpa [#allocation6], 1
    %831 = vsyncpa [#allocation9], 1
    %832 = vsyncpa [#allocation12], 1
    %833 = vsyncpa [#allocation4], 1

</llo_original>
